<compile_context>
chip_gen: v6e
topology: v6e:2x2x1
jax: 0.10.0
libtpu: 0.0.40
codegen_flags: <defaults>
</compile_context>

<pallas_src>
import functools

import jax
import jax.numpy as jnp
from jax.experimental import pallas as pl
from jax.experimental.pallas import tpu as pltpu


def _rel_kernel(shared_weights, idx_ref,
                f_ref, b_ref, lte_ref, rte_ref, *refs):
    """idx_ref (SMEM, int32[4]) = [cut0, start-1, end, cut1-1] (mod S)."""
    if shared_weights:                       # form == 0: head_w used twice
        w_left_ref, rel_w_ref, out_ref = refs
        w_right_ref = w_left_ref
    else:
        w_left_ref, w_right_ref, rel_w_ref, out_ref = refs

    H = w_left_ref.shape[1]

    i_c0 = idx_ref[0]
    i_sm1 = idx_ref[1]
    i_e = idx_ref[2]
    i_c1m1 = idx_ref[3]

    def row(ref, i):
        # Dynamic gather along the sequence (sublane) axis: [B,1,H] -> [B,H].
        return ref[:, pl.ds(i, 1), :][:, 0, :]

    # Span difference features (the pieces of the original concatenation).
    df_l = row(f_ref, i_c0) - row(f_ref, i_sm1)     # f[:,cut0] - f[:,start-1]
    db_l = row(b_ref, i_sm1) - row(b_ref, i_c0)     # b[:,start-1] - b[:,cut0]
    df_r = row(f_ref, i_e) - row(f_ref, i_c1m1)     # f[:,end] - f[:,cut1-1]
    db_r = row(b_ref, i_c1m1) - row(b_ref, i_e)     # b[:,cut1-1] - b[:,end]

    def dot(x, w):
        return jnp.dot(x, w, preferred_element_type=jnp.float32)

    # left_u @ W == df_l @ W[:H] + db_l @ W[H:2H] + left_type_embs @ W[2H:]
    lh = (dot(df_l, w_left_ref[:H, :])
          + dot(db_l, w_left_ref[H:2 * H, :])
          + dot(lte_ref[...], w_left_ref[2 * H:, :]))
    rh = (dot(df_r, w_right_ref[:H, :])
          + dot(db_r, w_right_ref[H:2 * H, :])
          + dot(rte_ref[...], w_right_ref[2 * H:, :]))

    # u = relu(cat(lh, rh)); out = u @ rel_W
    #   == relu(lh) @ rel_W[:H] + relu(rh) @ rel_W[H:]
    lh = jnp.maximum(lh, 0.0)
    rh = jnp.maximum(rh, 0.0)
    out_ref[...] = dot(lh, rel_w_ref[:H, :]) + dot(rh, rel_w_ref[H:, :])


def rel_model1_forward(start, end, cut0, cut1, f, b,
                       left_type_embs, right_type_embs, form, params):
    """JAX/Pallas equivalent of RelModel1.forward. `form` is a static int."""
    head_w, dep_w, rel_w = params["head_w"], params["dep_w"], params["rel_w"]
    B, S, _ = f.shape
    R = rel_w.shape[1]

    if form == 0:
        weights, shared = (head_w,), True
    elif form == 1:
        weights, shared = (head_w, dep_w), False
    elif form == 2:
        weights, shared = (dep_w, head_w), False
    else:
        raise ValueError("form must be 0, 1 or 2")

    # Modulo S replicates Python/PyTorch negative-index wrap (start-1 == -1).
    idx = jnp.asarray([cut0 % S, (start - 1) % S, end % S, (cut1 - 1) % S],
                      dtype=jnp.int32)

    vmem = pl.BlockSpec(memory_space=pltpu.MemorySpace.VMEM)
    n_in = 4 + len(weights) + 1            # f, b, lte, rte, weight(s), rel_w

    grid_spec = pltpu.PrefetchScalarGridSpec(
        num_scalar_prefetch=1,
        grid=(1,),
        in_specs=[vmem] * n_in,
        out_specs=vmem,
    )

    return pl.pallas_call(
        functools.partial(_rel_kernel, shared),
        out_shape=jax.ShapeDtypeStruct((B, R), jnp.float32),
        grid_spec=grid_spec,
        compiler_params=pltpu.CompilerParams(
            dimension_semantics=("arbitrary",)),
    )(idx, f, b, left_type_embs, right_type_embs, *weights, rel_w)

# TODO(synk): if many (start,end,cut0,cut1) span pairs are scored per call,
# batch them into one pallas_call with a "parallel" pair-block grid axis so
# the matmul M dimension reaches 128-256 (and both v7x TensorCores are used).


def _reference(start, end, cut0, cut1, f, b, lte, rte, form, params):
    """Pure-JAX reference mirroring the PyTorch forward."""
    head_w, dep_w, rel_w = params["head_w"], params["dep_w"], params["rel_w"]
    left_u = jnp.concatenate(
        [f[:, cut0, :] - f[:, start - 1, :],
         b[:, start - 1, :] - b[:, cut0, :], lte], axis=1)
    right_u = jnp.concatenate(
        [f[:, end, :] - f[:, cut1 - 1, :],
         b[:, cut1 - 1, :] - b[:, end, :], rte], axis=1)
    if form == 0:
        lu, ru = left_u @ head_w, right_u @ head_w
    elif form == 1:
        lu, ru = left_u @ head_w, right_u @ dep_w
    else:
        lu, ru = left_u @ dep_w, right_u @ head_w
    u = jax.nn.relu(jnp.concatenate([lu, ru], axis=1))
    return u @ rel_w


if __name__ == "__main__":
    # batch, seq, hidden, type_dim, relation_num (module defaults: 13, 10)
    B, S, H, T, R = 2, 8, 32, 10, 13

    key = jax.random.PRNGKey(0)
    k_f, k_b, k_lte, k_rte, k_hw, k_dw, k_rw = jax.random.split(key, 7)

    f = jax.random.normal(k_f, (B, S, H), jnp.float32)
    b = jax.random.normal(k_b, (B, S, H), jnp.float32)
    left_type_embs = jax.random.normal(k_lte, (B, T), jnp.float32)
    right_type_embs = jax.random.normal(k_rte, (B, T), jnp.float32)

    in_dim = 2 * H + T
    scale = 1.0 / jnp.sqrt(jnp.float32(in_dim))
    params = {
        # nn.Linear (bias=False) weights, pre-transposed to [in, out]:
        "head_w": jax.random.uniform(k_hw, (in_dim, H), jnp.float32, -scale, scale),
        "dep_w":  jax.random.uniform(k_dw, (in_dim, H), jnp.float32, -scale, scale),
        # rel_W is torch.randn(2H, R):
        "rel_w":  jax.random.normal(k_rw, (2 * H, R), jnp.float32),
    }

    start, end, cut0, cut1 = 3, 6, 4, 5

    ok = True
    for form in (0, 1, 2):
        out = rel_model1_forward(start, end, cut0, cut1, f, b,
                                 left_type_embs, right_type_embs, form, params)
        out = jax.block_until_ready(out)
        ref = _reference(start, end, cut0, cut1, f, b,
                         left_type_embs, right_type_embs, form, params)
        ok &= out.shape == (B, R)
        ok &= bool(jnp.allclose(out, ref, atol=1e-4, rtol=1e-4))

    assert ok
    print("KERNEL_OK")
</pallas_src>

<mosaic_0001>
module attributes {stable_mosaic.version = 11 : i64} {
  func.func @_rel_kernel(%arg0: i32, %arg1: memref<4xi32, #tpu.memory_space<smem>>, %arg2: memref<2x8x32xf32, #tpu.memory_space<vmem>>, %arg3: memref<2x8x32xf32, #tpu.memory_space<vmem>>, %arg4: memref<2x10xf32, #tpu.memory_space<vmem>>, %arg5: memref<2x10xf32, #tpu.memory_space<vmem>>, %arg6: memref<74x32xf32, #tpu.memory_space<vmem>>, %arg7: memref<64x13xf32, #tpu.memory_space<vmem>>, %arg8: memref<2x13xf32, #tpu.memory_space<vmem>>) attributes {dimension_semantics = [#tpu.dimension_semantics<arbitrary>], iteration_bounds = array<i64: 1>, scalar_prefetch = 1 : i64, scratch_operands = 0 : i64, tpu.core_type = #tpu.core_type<tc>, window_params = [{pipeline_mode = #tpu.pipeline_mode<synchronous>, transform_indices = @transform_0, window_bounds = array<i64: 2, 8, 32>}, {pipeline_mode = #tpu.pipeline_mode<synchronous>, transform_indices = @transform_1, window_bounds = array<i64: 2, 8, 32>}, {pipeline_mode = #tpu.pipeline_mode<synchronous>, transform_indices = @transform_2, window_bounds = array<i64: 2, 10>}, {pipeline_mode = #tpu.pipeline_mode<synchronous>, transform_indices = @transform_3, window_bounds = array<i64: 2, 10>}, {pipeline_mode = #tpu.pipeline_mode<synchronous>, transform_indices = @transform_4, window_bounds = array<i64: 74, 32>}, {pipeline_mode = #tpu.pipeline_mode<synchronous>, transform_indices = @transform_5, window_bounds = array<i64: 64, 13>}, {pipeline_mode = #tpu.pipeline_mode<synchronous>, transform_indices = @transform_6, window_bounds = array<i64: 2, 13>}]} {
    %c0 = arith.constant 0 : index
    %0 = memref.load %arg1[%c0] : memref<4xi32, #tpu.memory_space<smem>>
    %c1 = arith.constant 1 : index
    %1 = memref.load %arg1[%c1] : memref<4xi32, #tpu.memory_space<smem>>
    %c2 = arith.constant 2 : index
    %2 = memref.load %arg1[%c2] : memref<4xi32, #tpu.memory_space<smem>>
    %c3 = arith.constant 3 : index
    %3 = memref.load %arg1[%c3] : memref<4xi32, #tpu.memory_space<smem>>
    %c0_0 = arith.constant 0 : index
    %4 = arith.index_cast %0 : i32 to index
    %c0_1 = arith.constant 0 : index
    %5 = vector.load %arg2[%c0_0, %4, %c0_1] : memref<2x8x32xf32, #tpu.memory_space<vmem>>, vector<2x1x32xf32>
    %6 = vector.shape_cast %5 : vector<2x1x32xf32> to vector<2x32xf32>
    %c0_2 = arith.constant 0 : index
    %7 = arith.index_cast %1 : i32 to index
    %c0_3 = arith.constant 0 : index
    %8 = vector.load %arg2[%c0_2, %7, %c0_3] : memref<2x8x32xf32, #tpu.memory_space<vmem>>, vector<2x1x32xf32>
    %9 = vector.shape_cast %8 : vector<2x1x32xf32> to vector<2x32xf32>
    %10 = arith.subf %6, %9 : vector<2x32xf32>
    %c0_4 = arith.constant 0 : index
    %11 = arith.index_cast %1 : i32 to index
    %c0_5 = arith.constant 0 : index
    %12 = vector.load %arg3[%c0_4, %11, %c0_5] : memref<2x8x32xf32, #tpu.memory_space<vmem>>, vector<2x1x32xf32>
    %13 = vector.shape_cast %12 : vector<2x1x32xf32> to vector<2x32xf32>
    %c0_6 = arith.constant 0 : index
    %14 = arith.index_cast %0 : i32 to index
    %c0_7 = arith.constant 0 : index
    %15 = vector.load %arg3[%c0_6, %14, %c0_7] : memref<2x8x32xf32, #tpu.memory_space<vmem>>, vector<2x1x32xf32>
    %16 = vector.shape_cast %15 : vector<2x1x32xf32> to vector<2x32xf32>
    %17 = arith.subf %13, %16 : vector<2x32xf32>
    %c0_8 = arith.constant 0 : index
    %18 = arith.index_cast %2 : i32 to index
    %c0_9 = arith.constant 0 : index
    %19 = vector.load %arg2[%c0_8, %18, %c0_9] : memref<2x8x32xf32, #tpu.memory_space<vmem>>, vector<2x1x32xf32>
    %20 = vector.shape_cast %19 : vector<2x1x32xf32> to vector<2x32xf32>
    %c0_10 = arith.constant 0 : index
    %21 = arith.index_cast %3 : i32 to index
    %c0_11 = arith.constant 0 : index
    %22 = vector.load %arg2[%c0_10, %21, %c0_11] : memref<2x8x32xf32, #tpu.memory_space<vmem>>, vector<2x1x32xf32>
    %23 = vector.shape_cast %22 : vector<2x1x32xf32> to vector<2x32xf32>
    %24 = arith.subf %20, %23 : vector<2x32xf32>
    %c0_12 = arith.constant 0 : index
    %25 = arith.index_cast %3 : i32 to index
    %c0_13 = arith.constant 0 : index
    %26 = vector.load %arg3[%c0_12, %25, %c0_13] : memref<2x8x32xf32, #tpu.memory_space<vmem>>, vector<2x1x32xf32>
    %27 = vector.shape_cast %26 : vector<2x1x32xf32> to vector<2x32xf32>
    %c0_14 = arith.constant 0 : index
    %28 = arith.index_cast %2 : i32 to index
    %c0_15 = arith.constant 0 : index
    %29 = vector.load %arg3[%c0_14, %28, %c0_15] : memref<2x8x32xf32, #tpu.memory_space<vmem>>, vector<2x1x32xf32>
    %30 = vector.shape_cast %29 : vector<2x1x32xf32> to vector<2x32xf32>
    %31 = arith.subf %27, %30 : vector<2x32xf32>
    %c0_16 = arith.constant 0 : index
    %c0_17 = arith.constant 0 : index
    %32 = vector.load %arg6[%c0_16, %c0_17] : memref<74x32xf32, #tpu.memory_space<vmem>>, vector<32x32xf32>
    %cst = arith.constant dense<0.000000e+00> : vector<2x32xf32>
    %33 = tpu.matmul %10, %32, %cst {dimension_numbers = #tpu.dot_dimension_numbers<[1], [0], [0], [1], [0, 0, 1, 1], [], []>} : vector<2x32xf32>, vector<32x32xf32>, vector<2x32xf32> -> vector<2x32xf32>
    %c32 = arith.constant 32 : index
    %c0_18 = arith.constant 0 : index
    %34 = vector.load %arg6[%c32, %c0_18] : memref<74x32xf32, #tpu.memory_space<vmem>>, vector<32x32xf32>
    %cst_19 = arith.constant dense<0.000000e+00> : vector<2x32xf32>
    %35 = tpu.matmul %17, %34, %cst_19 {dimension_numbers = #tpu.dot_dimension_numbers<[1], [0], [0], [1], [0, 0, 1, 1], [], []>} : vector<2x32xf32>, vector<32x32xf32>, vector<2x32xf32> -> vector<2x32xf32>
    %36 = arith.addf %33, %35 : vector<2x32xf32>
    %c0_20 = arith.constant 0 : index
    %c0_21 = arith.constant 0 : index
    %37 = vector.load %arg4[%c0_20, %c0_21] : memref<2x10xf32, #tpu.memory_space<vmem>>, vector<2x10xf32>
    %c64 = arith.constant 64 : index
    %c0_22 = arith.constant 0 : index
    %38 = vector.load %arg6[%c64, %c0_22] : memref<74x32xf32, #tpu.memory_space<vmem>>, vector<10x32xf32>
    %cst_23 = arith.constant dense<0.000000e+00> : vector<2x32xf32>
    %39 = tpu.matmul %37, %38, %cst_23 {dimension_numbers = #tpu.dot_dimension_numbers<[1], [0], [0], [1], [0, 0, 1, 1], [], []>} : vector<2x10xf32>, vector<10x32xf32>, vector<2x32xf32> -> vector<2x32xf32>
    %40 = arith.addf %36, %39 : vector<2x32xf32>
    %c0_24 = arith.constant 0 : index
    %c0_25 = arith.constant 0 : index
    %41 = vector.load %arg6[%c0_24, %c0_25] : memref<74x32xf32, #tpu.memory_space<vmem>>, vector<32x32xf32>
    %cst_26 = arith.constant dense<0.000000e+00> : vector<2x32xf32>
    %42 = tpu.matmul %24, %41, %cst_26 {dimension_numbers = #tpu.dot_dimension_numbers<[1], [0], [0], [1], [0, 0, 1, 1], [], []>} : vector<2x32xf32>, vector<32x32xf32>, vector<2x32xf32> -> vector<2x32xf32>
    %c32_27 = arith.constant 32 : index
    %c0_28 = arith.constant 0 : index
    %43 = vector.load %arg6[%c32_27, %c0_28] : memref<74x32xf32, #tpu.memory_space<vmem>>, vector<32x32xf32>
    %cst_29 = arith.constant dense<0.000000e+00> : vector<2x32xf32>
    %44 = tpu.matmul %31, %43, %cst_29 {dimension_numbers = #tpu.dot_dimension_numbers<[1], [0], [0], [1], [0, 0, 1, 1], [], []>} : vector<2x32xf32>, vector<32x32xf32>, vector<2x32xf32> -> vector<2x32xf32>
    %45 = arith.addf %42, %44 : vector<2x32xf32>
    %c0_30 = arith.constant 0 : index
    %c0_31 = arith.constant 0 : index
    %46 = vector.load %arg5[%c0_30, %c0_31] : memref<2x10xf32, #tpu.memory_space<vmem>>, vector<2x10xf32>
    %c64_32 = arith.constant 64 : index
    %c0_33 = arith.constant 0 : index
    %47 = vector.load %arg6[%c64_32, %c0_33] : memref<74x32xf32, #tpu.memory_space<vmem>>, vector<10x32xf32>
    %cst_34 = arith.constant dense<0.000000e+00> : vector<2x32xf32>
    %48 = tpu.matmul %46, %47, %cst_34 {dimension_numbers = #tpu.dot_dimension_numbers<[1], [0], [0], [1], [0, 0, 1, 1], [], []>} : vector<2x10xf32>, vector<10x32xf32>, vector<2x32xf32> -> vector<2x32xf32>
    %49 = arith.addf %45, %48 : vector<2x32xf32>
    %cst_35 = arith.constant 0.000000e+00 : f32
    %50 = vector.broadcast %cst_35 : f32 to vector<2x32xf32>
    %51 = arith.maximumf %40, %50 : vector<2x32xf32>
    %cst_36 = arith.constant 0.000000e+00 : f32
    %52 = vector.broadcast %cst_36 : f32 to vector<2x32xf32>
    %53 = arith.maximumf %49, %52 : vector<2x32xf32>
    %c0_37 = arith.constant 0 : index
    %c0_38 = arith.constant 0 : index
    %54 = vector.load %arg7[%c0_37, %c0_38] : memref<64x13xf32, #tpu.memory_space<vmem>>, vector<32x13xf32>
    %cst_39 = arith.constant dense<0.000000e+00> : vector<2x13xf32>
    %55 = tpu.matmul %51, %54, %cst_39 {dimension_numbers = #tpu.dot_dimension_numbers<[1], [0], [0], [1], [0, 0, 1, 1], [], []>} : vector<2x32xf32>, vector<32x13xf32>, vector<2x13xf32> -> vector<2x13xf32>
    %c32_40 = arith.constant 32 : index
    %c0_41 = arith.constant 0 : index
    %56 = vector.load %arg7[%c32_40, %c0_41] : memref<64x13xf32, #tpu.memory_space<vmem>>, vector<32x13xf32>
    %cst_42 = arith.constant dense<0.000000e+00> : vector<2x13xf32>
    %57 = tpu.matmul %53, %56, %cst_42 {dimension_numbers = #tpu.dot_dimension_numbers<[1], [0], [0], [1], [0, 0, 1, 1], [], []>} : vector<2x32xf32>, vector<32x13xf32>, vector<2x13xf32> -> vector<2x13xf32>
    %58 = arith.addf %55, %57 : vector<2x13xf32>
    %c0_43 = arith.constant 0 : index
    %c0_44 = arith.constant 0 : index
    %59 = vector.load %arg8[%c0_43, %c0_44] : memref<2x13xf32, #tpu.memory_space<vmem>>, vector<2x13xf32>
    tpu.vector_store %arg8[%c0_43, %c0_44], %58 {strides = array<i32>} : memref<2x13xf32, #tpu.memory_space<vmem>>, vector<2x13xf32>,
    return
  }
  func.func @transform_0(%arg0: i32, %arg1: memref<4xi32, #tpu.memory_space<smem>>) -> (i32, i32, i32) {
    %c0_i32 = arith.constant 0 : i32
    %c0_i32_0 = arith.constant 0 : i32
    %c0_i32_1 = arith.constant 0 : i32
    %c0_i32_2 = arith.constant 0 : i32
    return %c0_i32, %c0_i32_0, %c0_i32_1 : i32, i32, i32
  }
  func.func @transform_1(%arg0: i32, %arg1: memref<4xi32, #tpu.memory_space<smem>>) -> (i32, i32, i32) {
    %c0_i32 = arith.constant 0 : i32
    %c0_i32_0 = arith.constant 0 : i32
    %c0_i32_1 = arith.constant 0 : i32
    %c0_i32_2 = arith.constant 0 : i32
    return %c0_i32, %c0_i32_0, %c0_i32_1 : i32, i32, i32
  }
  func.func @transform_2(%arg0: i32, %arg1: memref<4xi32, #tpu.memory_space<smem>>) -> (i32, i32) {
    %c0_i32 = arith.constant 0 : i32
    %c0_i32_0 = arith.constant 0 : i32
    %c0_i32_1 = arith.constant 0 : i32
    return %c0_i32, %c0_i32_0 : i32, i32
  }
  func.func @transform_3(%arg0: i32, %arg1: memref<4xi32, #tpu.memory_space<smem>>) -> (i32, i32) {
    %c0_i32 = arith.constant 0 : i32
    %c0_i32_0 = arith.constant 0 : i32
    %c0_i32_1 = arith.constant 0 : i32
    return %c0_i32, %c0_i32_0 : i32, i32
  }
  func.func @transform_4(%arg0: i32, %arg1: memref<4xi32, #tpu.memory_space<smem>>) -> (i32, i32) {
    %c0_i32 = arith.constant 0 : i32
    %c0_i32_0 = arith.constant 0 : i32
    %c0_i32_1 = arith.constant 0 : i32
    return %c0_i32, %c0_i32_0 : i32, i32
  }
  func.func @transform_5(%arg0: i32, %arg1: memref<4xi32, #tpu.memory_space<smem>>) -> (i32, i32) {
    %c0_i32 = arith.constant 0 : i32
    %c0_i32_0 = arith.constant 0 : i32
    %c0_i32_1 = arith.constant 0 : i32
    return %c0_i32, %c0_i32_0 : i32, i32
  }
  func.func @transform_6(%arg0: i32, %arg1: memref<4xi32, #tpu.memory_space<smem>>) -> (i32, i32) {
    %c0_i32 = arith.constant 0 : i32
    %c0_i32_0 = arith.constant 0 : i32
    %c0_i32_1 = arith.constant 0 : i32
    return %c0_i32, %c0_i32_0 : i32, i32
  }
}

</mosaic_0001>

<llo_original>
// kernel: tpu_custom_call.1
$region0: #{tpu_custom_call.1}
  #allocation0 [shape = 'u32[]', space=smem, size = 0x4, offset = 0x4, fixed_abs, tag = 'smem constant byte address 0x4 - core index']
  #allocation1 [shape = 'u32[144,128]{1,0:T(1,128)}', space=vmem, size = 0x12000, scoped, tag = 'internal scratch']
  #allocation2 [shape = 's32[1]{0}', space=sflag, size = 0x4, scoped, tag = 'scoped memory for tpu_custom_call.1']
  #allocation3 [shape = 'u8[512]{0}', space=smem, size = 0x200, scoped, tag = 'prefetched SMEM operand 0']
  %s0 = inlined_call_operand.vmem [shape: s32[4], index: 0, kind: input, shape index: {}]
  %s1 = inlined_call_operand.vmem [shape: f32[2,8,32], index: 1, kind: input, shape index: {}]
  %s2 = inlined_call_operand.vmem [shape: f32[2,8,32], index: 2, kind: input, shape index: {}]
  %s3 = inlined_call_operand.vmem [shape: f32[2,10], index: 3, kind: input, shape index: {}]
  %s4 = inlined_call_operand.vmem [shape: f32[2,10], index: 4, kind: input, shape index: {}]
  %s5 = inlined_call_operand.vmem [shape: f32[74,32], index: 5, kind: input, shape index: {}]
  %s6 = inlined_call_operand.vmem [shape: f32[64,13], index: 6, kind: input, shape index: {}]
  %s7 = inlined_call_operand.hbm [shape: f32[2,13], index: 7, kind: output, shape index: {}]
  %s8 = sld [smem:[#allocation0]]
  $region34: #{tpu_custom_call.1} parent=0
    _
  %s10 = ssub.s32 1, %s8
  %s11 = scalar_select 0, %s10, %s8
  %s12 = sshll.u32 %s0, 4
  %s13 = int_to_ptr.vmem [resolvable:$true] %s12
  %15 = dma.vmem_to_smem %s13, 16, [#allocation3], [#allocation2]
  %16 = dma.done [#allocation2], 16
  %17 = sfence
  $region1: #{tpu_custom_call.1} parent=0
    #allocation4 [shape = 'u8[1024]{0}', space=vmem, size = 0x400, scoped, tag = 'output window, operand 0, single buffered']
    #allocation5 [shape = 's32[1]{0}', space=sflag, size = 0x4, scoped, tag = 'scoped memory for tpu_custom_call.1']
    %18 = vsyncpa [#allocation5], 0
    // Predicated region
    $region2: #{tpu_custom_call.1} parent=1 // pred_check
      _
    $region3: #{tpu_custom_call.1} parent=1 // pred_check_branch
      %20 = sbr.rel (0) target = $region5
    $region4: #{tpu_custom_call.1} parent=1 // pred_region
      _
    $region5: #{tpu_custom_call.1} parent=1 // pred_fallthru
      _
    // Predicated region
    $region6: #{tpu_custom_call.1} parent=1 // pred_check
      _
    $region7: #{tpu_custom_call.1} parent=1 // pred_check_branch
      %22 = sbr.rel (0) target = $region9
    $region8: #{tpu_custom_call.1} parent=1 // pred_region
      _
    $region9: #{tpu_custom_call.1} parent=1 // pred_fallthru
      _
    // Predicated region
    $region10: #{tpu_custom_call.1} parent=1 // pred_check
      _
    $region11: #{tpu_custom_call.1} parent=1 // pred_check_branch
      %24 = sbr.rel (0) target = $region13
    $region12: #{tpu_custom_call.1} parent=1 // pred_region
      _
    $region13: #{tpu_custom_call.1} parent=1 // pred_fallthru
      _
    // Predicated region
    $region14: #{tpu_custom_call.1} parent=1 // pred_check
      _
    $region15: #{tpu_custom_call.1} parent=1 // pred_check_branch
      %26 = sbr.rel (0) target = $region17
    $region16: #{tpu_custom_call.1} parent=1 // pred_region
      _
    $region17: #{tpu_custom_call.1} parent=1 // pred_fallthru
      _
    // Predicated region
    $region18: #{tpu_custom_call.1} parent=1 // pred_check
      _
    $region19: #{tpu_custom_call.1} parent=1 // pred_check_branch
      %28 = sbr.rel (0) target = $region21
    $region20: #{tpu_custom_call.1} parent=1 // pred_region
      _
    $region21: #{tpu_custom_call.1} parent=1 // pred_fallthru
      _
    // Predicated region
    $region22: #{tpu_custom_call.1} parent=1 // pred_check
      _
    $region23: #{tpu_custom_call.1} parent=1 // pred_check_branch
      %30 = sbr.rel (0) target = $region25
    $region24: #{tpu_custom_call.1} parent=1 // pred_region
      _
    $region25: #{tpu_custom_call.1} parent=1 // pred_fallthru
      _
    %s31 = sld [smem:[#allocation3]]
    %s32 = sld [smem:[#allocation3 + $0x1]]
    %s33 = sld [smem:[#allocation3 + $0x2]]
    %s34 = sld [smem:[#allocation3 + $0x3]]
    %s35 = scalar_lea.vmem %s1, %s31
    %v36 = vld [vmem:[%s35] sm:$0x1]
    %v37 = vld [vmem:[%s35 + $0x8] sm:$0x1]
    %s38 = scalar_lea.vmem %s1, %s32
    %v39 = vld [vmem:[%s38] sm:$0x1]
    %v40 = vld [vmem:[%s38 + $0x8] sm:$0x1]
    %v41 = vsub.f32 %v36, %v39
    %v42 = vsub.f32 %v37, %v40
    %s43 = scalar_lea.vmem %s2, %s32
    %v44 = vld [vmem:[%s43] sm:$0x1]
    %v45 = vld [vmem:[%s43 + $0x8] sm:$0x1]
    %s46 = scalar_lea.vmem %s2, %s31
    %v47 = vld [vmem:[%s46] sm:$0x1]
    %v48 = vld [vmem:[%s46 + $0x8] sm:$0x1]
    %v49 = vsub.f32 %v44, %v47
    %v50 = vsub.f32 %v45, %v48
    %s51 = scalar_lea.vmem %s1, %s33
    %v52 = vld [vmem:[%s51] sm:$0x1]
    %v53 = vld [vmem:[%s51 + $0x8] sm:$0x1]
    %s54 = scalar_lea.vmem %s1, %s34
    %v55 = vld [vmem:[%s54] sm:$0x1]
    %v56 = vld [vmem:[%s54 + $0x8] sm:$0x1]
    %v57 = vsub.f32 %v52, %v55
    %v58 = vsub.f32 %v53, %v56
    %s59 = scalar_lea.vmem %s2, %s34
    %v60 = vld [vmem:[%s59] sm:$0x1]
    %v61 = vld [vmem:[%s59 + $0x8] sm:$0x1]
    %s62 = scalar_lea.vmem %s2, %s33
    %v63 = vld [vmem:[%s62] sm:$0x1]
    %v64 = vld [vmem:[%s62 + $0x8] sm:$0x1]
    %v65 = vsub.f32 %v60, %v63
    %v66 = vsub.f32 %v61, %v64
    %v67 = vld [vmem:[%s5] sm:$0xff]
    %v68 = vld [vmem:[%s5 + $0x8] sm:$0xff]
    %v69 = vld [vmem:[%s5 + $0x10] sm:$0xff]
    %v70 = vld [vmem:[%s5 + $0x18] sm:$0xff]
    %v71 = vld [vmem:[%s5 + $0x20] sm:$0xff]
    %v72 = vld [vmem:[%s5 + $0x28] sm:$0xff]
    %v73 = vld [vmem:[%s5 + $0x30] sm:$0xff]
    %v74 = vld [vmem:[%s5 + $0x38] sm:$0xff]
    %v77 = vrot.slane %v50, 7
    %vm78 = vcmask 1041409
    %v79 = vsel %vm78, %v77, %v49
    %vm80 = vcmask 261120
    %v81 = vsel %vm80, %v79, 0
    %83 = vmatprep.subr.mxu0 0.0
    %84 = vmatpush1.msra.mxu0 0.0
    %85 = vmatprep.subr.mxu0 0.0
    %86 = vmatpush1.msra.mxu0 0.0
    %87 = vmatprep.subr.mxu0 0.0
    %88 = vmatpush1.msra.mxu0 0.0
    %89 = vmatprep.subr.mxu0 0.0
    %90 = vmatpush1.msra.mxu0 0.0
    %91 = vmatprep.subr.mxu0 0.0
    %92 = vmatpush1.msra.mxu0 0.0
    %93 = vmatprep.subr.mxu0 0.0
    %94 = vmatpush1.msra.mxu0 0.0
    %95 = vmatprep.subr.mxu0 0.0
    %96 = vmatpush1.msra.mxu0 0.0
    %97 = vmatprep.subr.mxu0 0.0
    %98 = vmatpush1.msra.mxu0 0.0
    %99 = vmatprep.subr.mxu0 0.0
    %100 = vmatpush1.msra.mxu0 0.0
    %101 = vmatprep.subr.mxu0 0.0
    %102 = vmatpush1.msra.mxu0 0.0
    %103 = vmatprep.subr.mxu0 0.0
    %104 = vmatpush1.msra.mxu0 0.0
    %105 = vmatprep.subr.mxu0 0.0
    %106 = vmatpush1.msra.mxu0 0.0
    %107 = vmatprep.subr.mxu0 0.0
    %108 = vmatpush1.msra.mxu0 %v74
    %109 = vmatprep.subr.mxu0 0.0
    %110 = vmatpush1.msra.mxu0 %v73
    %111 = vmatprep.subr.mxu0 0.0
    %112 = vmatpush1.msra.mxu0 %v72
    %113 = vmatprep.subr.mxu0 0.0
    %114 = vmatpush1.msra.mxu0 %v71
    %115 = vmatprep.subr.mxu0 0.0
    %116 = vmatpush2.msra.mxu0 0.0
    %117 = vmatprep.subr.mxu0 0.0
    %118 = vmatpush2.msra.mxu0 0.0
    %119 = vmatprep.subr.mxu0 0.0
    %120 = vmatpush2.msra.mxu0 0.0
    %121 = vmatprep.subr.mxu0 0.0
    %122 = vmatpush2.msra.mxu0 0.0
    %123 = vmatprep.subr.mxu0 0.0
    %124 = vmatpush2.msra.mxu0 0.0
    %125 = vmatprep.subr.mxu0 0.0
    %126 = vmatpush2.msra.mxu0 0.0
    %127 = vmatprep.subr.mxu0 0.0
    %128 = vmatpush2.msra.mxu0 0.0
    %129 = vmatprep.subr.mxu0 0.0
    %130 = vmatpush2.msra.mxu0 0.0
    %131 = vmatprep.subr.mxu0 0.0
    %132 = vmatpush2.msra.mxu0 0.0
    %133 = vmatprep.subr.mxu0 0.0
    %134 = vmatpush2.msra.mxu0 0.0
    %135 = vmatprep.subr.mxu0 0.0
    %136 = vmatpush2.msra.mxu0 0.0
    %137 = vmatprep.subr.mxu0 0.0
    %138 = vmatpush2.msra.mxu0 0.0
    %139 = vmatprep.subr.mxu0 0.0
    %140 = vmatpush2.msra.mxu0 0.0
    %141 = vmatprep.subr.mxu0 0.0
    %142 = vmatpush2.msra.mxu0 0.0
    %143 = vmatprep.subr.mxu0 0.0
    %144 = vmatpush2.msra.mxu0 0.0
    %145 = vmatprep.subr.mxu0 0.0
    %146 = vmatpush2.msra.mxu0 0.0
    %147 = vmatprep.mubr.f32.mxu0 0.0
    %148 = vmatmul.mubr.f32.gmra.mxu0 %v81
    %v149 = vpop.f32.mrf.mxu0
    %v150 = vadd.f32 0.0, %v149
    %v151 = vpop.f32.mrf.mxu0
    %152 = vdwg.mxu0
    %v155 = vrot.slane %v42, 7
    %v156 = vsel %vm78, %v155, %v41
    %v157 = vsel %vm80, %v156, 0
    %159 = vmatprep.subr.mxu0 0.0
    %160 = vmatpush1.msra.mxu0 0.0
    %161 = vmatprep.subr.mxu0 0.0
    %162 = vmatpush1.msra.mxu0 0.0
    %163 = vmatprep.subr.mxu0 0.0
    %164 = vmatpush1.msra.mxu0 0.0
    %165 = vmatprep.subr.mxu0 0.0
    %166 = vmatpush1.msra.mxu0 0.0
    %167 = vmatprep.subr.mxu0 0.0
    %168 = vmatpush1.msra.mxu0 0.0
    %169 = vmatprep.subr.mxu0 0.0
    %170 = vmatpush1.msra.mxu0 0.0
    %171 = vmatprep.subr.mxu0 0.0
    %172 = vmatpush1.msra.mxu0 0.0
    %173 = vmatprep.subr.mxu0 0.0
    %174 = vmatpush1.msra.mxu0 0.0
    %175 = vmatprep.subr.mxu0 0.0
    %176 = vmatpush1.msra.mxu0 0.0
    %177 = vmatprep.subr.mxu0 0.0
    %178 = vmatpush1.msra.mxu0 0.0
    %179 = vmatprep.subr.mxu0 0.0
    %180 = vmatpush1.msra.mxu0 0.0
    %181 = vmatprep.subr.mxu0 0.0
    %182 = vmatpush1.msra.mxu0 0.0
    %183 = vmatprep.subr.mxu0 0.0
    %184 = vmatpush1.msra.mxu0 %v70
    %185 = vmatprep.subr.mxu0 0.0
    %186 = vmatpush1.msra.mxu0 %v69
    %187 = vmatprep.subr.mxu0 0.0
    %188 = vmatpush1.msra.mxu0 %v68
    %189 = vmatprep.subr.mxu0 0.0
    %190 = vmatpush1.msra.mxu0 %v67
    %191 = vmatprep.subr.mxu0 0.0
    %192 = vmatpush2.msra.mxu0 0.0
    %193 = vmatprep.subr.mxu0 0.0
    %194 = vmatpush2.msra.mxu0 0.0
    %195 = vmatprep.subr.mxu0 0.0
    %196 = vmatpush2.msra.mxu0 0.0
    %197 = vmatprep.subr.mxu0 0.0
    %198 = vmatpush2.msra.mxu0 0.0
    %199 = vmatprep.subr.mxu0 0.0
    %200 = vmatpush2.msra.mxu0 0.0
    %201 = vmatprep.subr.mxu0 0.0
    %202 = vmatpush2.msra.mxu0 0.0
    %203 = vmatprep.subr.mxu0 0.0
    %204 = vmatpush2.msra.mxu0 0.0
    %205 = vmatprep.subr.mxu0 0.0
    %206 = vmatpush2.msra.mxu0 0.0
    %207 = vmatprep.subr.mxu0 0.0
    %208 = vmatpush2.msra.mxu0 0.0
    %209 = vmatprep.subr.mxu0 0.0
    %210 = vmatpush2.msra.mxu0 0.0
    %211 = vmatprep.subr.mxu0 0.0
    %212 = vmatpush2.msra.mxu0 0.0
    %213 = vmatprep.subr.mxu0 0.0
    %214 = vmatpush2.msra.mxu0 0.0
    %215 = vmatprep.subr.mxu0 0.0
    %216 = vmatpush2.msra.mxu0 0.0
    %217 = vmatprep.subr.mxu0 0.0
    %218 = vmatpush2.msra.mxu0 0.0
    %219 = vmatprep.subr.mxu0 0.0
    %220 = vmatpush2.msra.mxu0 0.0
    %221 = vmatprep.subr.mxu0 0.0
    %222 = vmatpush2.msra.mxu0 0.0
    %223 = vmatprep.mubr.f32.mxu0 0.0
    %224 = vmatmul.mubr.f32.gmra.mxu0 %v157
    %v225 = vpop.f32.mrf.mxu0
    %v226 = vadd.f32 %v150, %v225
    %v227 = vpop.f32.mrf.mxu0
    %228 = vdwg.mxu0
    %v229 = vld [vmem:[%s3] sm:$0x3]
    %v230 = vld [vmem:[%s5 + $0x40] sm:$0xff]
    %v231 = vld [vmem:[%s5 + $0x48] sm:$0x3]
    %vm232 = vcmask 80896
    %v234 = vsel %vm232, %v229, 0
    %vm236 = vcmask 1041408
    %v238 = vsel %vm236, %v231, 0
    %240 = vmatprep.subr.mxu0 0.0
    %241 = vmatpush1.msra.mxu0 0.0
    %242 = vmatprep.subr.mxu0 0.0
    %243 = vmatpush1.msra.mxu0 0.0
    %244 = vmatprep.subr.mxu0 0.0
    %245 = vmatpush1.msra.mxu0 0.0
    %246 = vmatprep.subr.mxu0 0.0
    %247 = vmatpush1.msra.mxu0 0.0
    %248 = vmatprep.subr.mxu0 0.0
    %249 = vmatpush1.msra.mxu0 0.0
    %250 = vmatprep.subr.mxu0 0.0
    %251 = vmatpush1.msra.mxu0 0.0
    %252 = vmatprep.subr.mxu0 0.0
    %253 = vmatpush1.msra.mxu0 0.0
    %254 = vmatprep.subr.mxu0 0.0
    %255 = vmatpush1.msra.mxu0 0.0
    %256 = vmatprep.subr.mxu0 0.0
    %257 = vmatpush1.msra.mxu0 0.0
    %258 = vmatprep.subr.mxu0 0.0
    %259 = vmatpush1.msra.mxu0 0.0
    %260 = vmatprep.subr.mxu0 0.0
    %261 = vmatpush1.msra.mxu0 0.0
    %262 = vmatprep.subr.mxu0 0.0
    %263 = vmatpush1.msra.mxu0 0.0
    %264 = vmatprep.subr.mxu0 0.0
    %265 = vmatpush1.msra.mxu0 0.0
    %266 = vmatprep.subr.mxu0 0.0
    %267 = vmatpush1.msra.mxu0 0.0
    %268 = vmatprep.subr.mxu0 0.0
    %269 = vmatpush1.msra.mxu0 %v238
    %270 = vmatprep.subr.mxu0 0.0
    %271 = vmatpush1.msra.mxu0 %v230
    %272 = vmatprep.subr.mxu0 0.0
    %273 = vmatpush2.msra.mxu0 0.0
    %274 = vmatprep.subr.mxu0 0.0
    %275 = vmatpush2.msra.mxu0 0.0
    %276 = vmatprep.subr.mxu0 0.0
    %277 = vmatpush2.msra.mxu0 0.0
    %278 = vmatprep.subr.mxu0 0.0
    %279 = vmatpush2.msra.mxu0 0.0
    %280 = vmatprep.subr.mxu0 0.0
    %281 = vmatpush2.msra.mxu0 0.0
    %282 = vmatprep.subr.mxu0 0.0
    %283 = vmatpush2.msra.mxu0 0.0
    %284 = vmatprep.subr.mxu0 0.0
    %285 = vmatpush2.msra.mxu0 0.0
    %286 = vmatprep.subr.mxu0 0.0
    %287 = vmatpush2.msra.mxu0 0.0
    %288 = vmatprep.subr.mxu0 0.0
    %289 = vmatpush2.msra.mxu0 0.0
    %290 = vmatprep.subr.mxu0 0.0
    %291 = vmatpush2.msra.mxu0 0.0
    %292 = vmatprep.subr.mxu0 0.0
    %293 = vmatpush2.msra.mxu0 0.0
    %294 = vmatprep.subr.mxu0 0.0
    %295 = vmatpush2.msra.mxu0 0.0
    %296 = vmatprep.subr.mxu0 0.0
    %297 = vmatpush2.msra.mxu0 0.0
    %298 = vmatprep.subr.mxu0 0.0
    %299 = vmatpush2.msra.mxu0 0.0
    %300 = vmatprep.subr.mxu0 0.0
    %301 = vmatpush2.msra.mxu0 0.0
    %302 = vmatprep.subr.mxu0 0.0
    %303 = vmatpush2.msra.mxu0 0.0
    %304 = vmatprep.mubr.f32.mxu0 0.0
    %305 = vmatmul.mubr.f32.gmra.mxu0 %v234
    %v306 = vpop.f32.mrf.mxu0
    %v307 = vadd.f32 0.0, %v306
    %v308 = vpop.f32.mrf.mxu0
    %309 = vdwg.mxu0
    %v310 = vadd.f32 %v226, %v307
    %v313 = vrot.slane %v66, 7
    %v314 = vsel %vm78, %v313, %v65
    %v315 = vsel %vm80, %v314, 0
    %317 = vmatprep.subr.mxu0 0.0
    %318 = vmatpush1.msra.mxu0 0.0
    %319 = vmatprep.subr.mxu0 0.0
    %320 = vmatpush1.msra.mxu0 0.0
    %321 = vmatprep.subr.mxu0 0.0
    %322 = vmatpush1.msra.mxu0 0.0
    %323 = vmatprep.subr.mxu0 0.0
    %324 = vmatpush1.msra.mxu0 0.0
    %325 = vmatprep.subr.mxu0 0.0
    %326 = vmatpush1.msra.mxu0 0.0
    %327 = vmatprep.subr.mxu0 0.0
    %328 = vmatpush1.msra.mxu0 0.0
    %329 = vmatprep.subr.mxu0 0.0
    %330 = vmatpush1.msra.mxu0 0.0
    %331 = vmatprep.subr.mxu0 0.0
    %332 = vmatpush1.msra.mxu0 0.0
    %333 = vmatprep.subr.mxu0 0.0
    %334 = vmatpush1.msra.mxu0 0.0
    %335 = vmatprep.subr.mxu0 0.0
    %336 = vmatpush1.msra.mxu0 0.0
    %337 = vmatprep.subr.mxu0 0.0
    %338 = vmatpush1.msra.mxu0 0.0
    %339 = vmatprep.subr.mxu0 0.0
    %340 = vmatpush1.msra.mxu0 0.0
    %341 = vmatprep.subr.mxu0 0.0
    %342 = vmatpush1.msra.mxu0 %v74
    %343 = vmatprep.subr.mxu0 0.0
    %344 = vmatpush1.msra.mxu0 %v73
    %345 = vmatprep.subr.mxu0 0.0
    %346 = vmatpush1.msra.mxu0 %v72
    %347 = vmatprep.subr.mxu0 0.0
    %348 = vmatpush1.msra.mxu0 %v71
    %349 = vmatprep.subr.mxu0 0.0
    %350 = vmatpush2.msra.mxu0 0.0
    %351 = vmatprep.subr.mxu0 0.0
    %352 = vmatpush2.msra.mxu0 0.0
    %353 = vmatprep.subr.mxu0 0.0
    %354 = vmatpush2.msra.mxu0 0.0
    %355 = vmatprep.subr.mxu0 0.0
    %356 = vmatpush2.msra.mxu0 0.0
    %357 = vmatprep.subr.mxu0 0.0
    %358 = vmatpush2.msra.mxu0 0.0
    %359 = vmatprep.subr.mxu0 0.0
    %360 = vmatpush2.msra.mxu0 0.0
    %361 = vmatprep.subr.mxu0 0.0
    %362 = vmatpush2.msra.mxu0 0.0
    %363 = vmatprep.subr.mxu0 0.0
    %364 = vmatpush2.msra.mxu0 0.0
    %365 = vmatprep.subr.mxu0 0.0
    %366 = vmatpush2.msra.mxu0 0.0
    %367 = vmatprep.subr.mxu0 0.0
    %368 = vmatpush2.msra.mxu0 0.0
    %369 = vmatprep.subr.mxu0 0.0
    %370 = vmatpush2.msra.mxu0 0.0
    %371 = vmatprep.subr.mxu0 0.0
    %372 = vmatpush2.msra.mxu0 0.0
    %373 = vmatprep.subr.mxu0 0.0
    %374 = vmatpush2.msra.mxu0 0.0
    %375 = vmatprep.subr.mxu0 0.0
    %376 = vmatpush2.msra.mxu0 0.0
    %377 = vmatprep.subr.mxu0 0.0
    %378 = vmatpush2.msra.mxu0 0.0
    %379 = vmatprep.subr.mxu0 0.0
    %380 = vmatpush2.msra.mxu0 0.0
    %381 = vmatprep.mubr.f32.mxu0 0.0
    %382 = vmatmul.mubr.f32.gmra.mxu0 %v315
    %v383 = vpop.f32.mrf.mxu0
    %v384 = vadd.f32 0.0, %v383
    %v385 = vpop.f32.mrf.mxu0
    %386 = vdwg.mxu0
    %v389 = vrot.slane %v58, 7
    %v390 = vsel %vm78, %v389, %v57
    %v391 = vsel %vm80, %v390, 0
    %393 = vmatprep.subr.mxu0 0.0
    %394 = vmatpush1.msra.mxu0 0.0
    %395 = vmatprep.subr.mxu0 0.0
    %396 = vmatpush1.msra.mxu0 0.0
    %397 = vmatprep.subr.mxu0 0.0
    %398 = vmatpush1.msra.mxu0 0.0
    %399 = vmatprep.subr.mxu0 0.0
    %400 = vmatpush1.msra.mxu0 0.0
    %401 = vmatprep.subr.mxu0 0.0
    %402 = vmatpush1.msra.mxu0 0.0
    %403 = vmatprep.subr.mxu0 0.0
    %404 = vmatpush1.msra.mxu0 0.0
    %405 = vmatprep.subr.mxu0 0.0
    %406 = vmatpush1.msra.mxu0 0.0
    %407 = vmatprep.subr.mxu0 0.0
    %408 = vmatpush1.msra.mxu0 0.0
    %409 = vmatprep.subr.mxu0 0.0
    %410 = vmatpush1.msra.mxu0 0.0
    %411 = vmatprep.subr.mxu0 0.0
    %412 = vmatpush1.msra.mxu0 0.0
    %413 = vmatprep.subr.mxu0 0.0
    %414 = vmatpush1.msra.mxu0 0.0
    %415 = vmatprep.subr.mxu0 0.0
    %416 = vmatpush1.msra.mxu0 0.0
    %417 = vmatprep.subr.mxu0 0.0
    %418 = vmatpush1.msra.mxu0 %v70
    %419 = vmatprep.subr.mxu0 0.0
    %420 = vmatpush1.msra.mxu0 %v69
    %421 = vmatprep.subr.mxu0 0.0
    %422 = vmatpush1.msra.mxu0 %v68
    %423 = vmatprep.subr.mxu0 0.0
    %424 = vmatpush1.msra.mxu0 %v67
    %425 = vmatprep.subr.mxu0 0.0
    %426 = vmatpush2.msra.mxu0 0.0
    %427 = vmatprep.subr.mxu0 0.0
    %428 = vmatpush2.msra.mxu0 0.0
    %429 = vmatprep.subr.mxu0 0.0
    %430 = vmatpush2.msra.mxu0 0.0
    %431 = vmatprep.subr.mxu0 0.0
    %432 = vmatpush2.msra.mxu0 0.0
    %433 = vmatprep.subr.mxu0 0.0
    %434 = vmatpush2.msra.mxu0 0.0
    %435 = vmatprep.subr.mxu0 0.0
    %436 = vmatpush2.msra.mxu0 0.0
    %437 = vmatprep.subr.mxu0 0.0
    %438 = vmatpush2.msra.mxu0 0.0
    %439 = vmatprep.subr.mxu0 0.0
    %440 = vmatpush2.msra.mxu0 0.0
    %441 = vmatprep.subr.mxu0 0.0
    %442 = vmatpush2.msra.mxu0 0.0
    %443 = vmatprep.subr.mxu0 0.0
    %444 = vmatpush2.msra.mxu0 0.0
    %445 = vmatprep.subr.mxu0 0.0
    %446 = vmatpush2.msra.mxu0 0.0
    %447 = vmatprep.subr.mxu0 0.0
    %448 = vmatpush2.msra.mxu0 0.0
    %449 = vmatprep.subr.mxu0 0.0
    %450 = vmatpush2.msra.mxu0 0.0
    %451 = vmatprep.subr.mxu0 0.0
    %452 = vmatpush2.msra.mxu0 0.0
    %453 = vmatprep.subr.mxu0 0.0
    %454 = vmatpush2.msra.mxu0 0.0
    %455 = vmatprep.subr.mxu0 0.0
    %456 = vmatpush2.msra.mxu0 0.0
    %457 = vmatprep.mubr.f32.mxu0 0.0
    %458 = vmatmul.mubr.f32.gmra.mxu0 %v391
    %v459 = vpop.f32.mrf.mxu0
    %v460 = vadd.f32 %v384, %v459
    %v461 = vpop.f32.mrf.mxu0
    %462 = vdwg.mxu0
    %v463 = vld [vmem:[%s4] sm:$0x3]
    %v465 = vsel %vm232, %v463, 0
    %467 = vmatprep.subr.mxu0 0.0
    %468 = vmatpush1.msra.mxu0 0.0
    %469 = vmatprep.subr.mxu0 0.0
    %470 = vmatpush1.msra.mxu0 0.0
    %471 = vmatprep.subr.mxu0 0.0
    %472 = vmatpush1.msra.mxu0 0.0
    %473 = vmatprep.subr.mxu0 0.0
    %474 = vmatpush1.msra.mxu0 0.0
    %475 = vmatprep.subr.mxu0 0.0
    %476 = vmatpush1.msra.mxu0 0.0
    %477 = vmatprep.subr.mxu0 0.0
    %478 = vmatpush1.msra.mxu0 0.0
    %479 = vmatprep.subr.mxu0 0.0
    %480 = vmatpush1.msra.mxu0 0.0
    %481 = vmatprep.subr.mxu0 0.0
    %482 = vmatpush1.msra.mxu0 0.0
    %483 = vmatprep.subr.mxu0 0.0
    %484 = vmatpush1.msra.mxu0 0.0
    %485 = vmatprep.subr.mxu0 0.0
    %486 = vmatpush1.msra.mxu0 0.0
    %487 = vmatprep.subr.mxu0 0.0
    %488 = vmatpush1.msra.mxu0 0.0
    %489 = vmatprep.subr.mxu0 0.0
    %490 = vmatpush1.msra.mxu0 0.0
    %491 = vmatprep.subr.mxu0 0.0
    %492 = vmatpush1.msra.mxu0 0.0
    %493 = vmatprep.subr.mxu0 0.0
    %494 = vmatpush1.msra.mxu0 0.0
    %495 = vmatprep.subr.mxu0 0.0
    %496 = vmatpush1.msra.mxu0 %v238
    %497 = vmatprep.subr.mxu0 0.0
    %498 = vmatpush1.msra.mxu0 %v230
    %499 = vmatprep.subr.mxu0 0.0
    %500 = vmatpush2.msra.mxu0 0.0
    %501 = vmatprep.subr.mxu0 0.0
    %502 = vmatpush2.msra.mxu0 0.0
    %503 = vmatprep.subr.mxu0 0.0
    %504 = vmatpush2.msra.mxu0 0.0
    %505 = vmatprep.subr.mxu0 0.0
    %506 = vmatpush2.msra.mxu0 0.0
    %507 = vmatprep.subr.mxu0 0.0
    %508 = vmatpush2.msra.mxu0 0.0
    %509 = vmatprep.subr.mxu0 0.0
    %510 = vmatpush2.msra.mxu0 0.0
    %511 = vmatprep.subr.mxu0 0.0
    %512 = vmatpush2.msra.mxu0 0.0
    %513 = vmatprep.subr.mxu0 0.0
    %514 = vmatpush2.msra.mxu0 0.0
    %515 = vmatprep.subr.mxu0 0.0
    %516 = vmatpush2.msra.mxu0 0.0
    %517 = vmatprep.subr.mxu0 0.0
    %518 = vmatpush2.msra.mxu0 0.0
    %519 = vmatprep.subr.mxu0 0.0
    %520 = vmatpush2.msra.mxu0 0.0
    %521 = vmatprep.subr.mxu0 0.0
    %522 = vmatpush2.msra.mxu0 0.0
    %523 = vmatprep.subr.mxu0 0.0
    %524 = vmatpush2.msra.mxu0 0.0
    %525 = vmatprep.subr.mxu0 0.0
    %526 = vmatpush2.msra.mxu0 0.0
    %527 = vmatprep.subr.mxu0 0.0
    %528 = vmatpush2.msra.mxu0 0.0
    %529 = vmatprep.subr.mxu0 0.0
    %530 = vmatpush2.msra.mxu0 0.0
    %531 = vmatprep.mubr.f32.mxu0 0.0
    %532 = vmatmul.mubr.f32.gmra.mxu0 %v465
    %v533 = vpop.f32.mrf.mxu0
    %v534 = vadd.f32 0.0, %v533
    %v535 = vpop.f32.mrf.mxu0
    %536 = vdwg.mxu0
    %v537 = vadd.f32 %v460, %v534
    %v538 = vmax.f32 %v310, 0.0
    %v539 = vmax.f32 %v537, 0.0
    %v540 = vld [vmem:[%s6] sm:$0xff]
    %v541 = vld [vmem:[%s6 + $0x8] sm:$0xff]
    %v542 = vld [vmem:[%s6 + $0x10] sm:$0xff]
    %v543 = vld [vmem:[%s6 + $0x18] sm:$0xff]
    %v544 = vld [vmem:[%s6 + $0x20] sm:$0xff]
    %v545 = vld [vmem:[%s6 + $0x28] sm:$0xff]
    %v546 = vld [vmem:[%s6 + $0x30] sm:$0xff]
    %v547 = vld [vmem:[%s6 + $0x38] sm:$0xff]
    %v549 = vsel %vm80, %v539, 0
    %551 = vmatprep.subr.mxu0 0.0
    %552 = vmatpush1.msra.mxu0 0.0
    %553 = vmatprep.subr.mxu0 0.0
    %554 = vmatpush1.msra.mxu0 0.0
    %555 = vmatprep.subr.mxu0 0.0
    %556 = vmatpush1.msra.mxu0 0.0
    %557 = vmatprep.subr.mxu0 0.0
    %558 = vmatpush1.msra.mxu0 0.0
    %559 = vmatprep.subr.mxu0 0.0
    %560 = vmatpush1.msra.mxu0 0.0
    %561 = vmatprep.subr.mxu0 0.0
    %562 = vmatpush1.msra.mxu0 0.0
    %563 = vmatprep.subr.mxu0 0.0
    %564 = vmatpush1.msra.mxu0 0.0
    %565 = vmatprep.subr.mxu0 0.0
    %566 = vmatpush1.msra.mxu0 0.0
    %567 = vmatprep.subr.mxu0 0.0
    %568 = vmatpush1.msra.mxu0 0.0
    %569 = vmatprep.subr.mxu0 0.0
    %570 = vmatpush1.msra.mxu0 0.0
    %571 = vmatprep.subr.mxu0 0.0
    %572 = vmatpush1.msra.mxu0 0.0
    %573 = vmatprep.subr.mxu0 0.0
    %574 = vmatpush1.msra.mxu0 0.0
    %575 = vmatprep.subr.mxu0 0.0
    %576 = vmatpush1.msra.mxu0 %v547
    %577 = vmatprep.subr.mxu0 0.0
    %578 = vmatpush1.msra.mxu0 %v546
    %579 = vmatprep.subr.mxu0 0.0
    %580 = vmatpush1.msra.mxu0 %v545
    %581 = vmatprep.subr.mxu0 0.0
    %582 = vmatpush1.msra.mxu0 %v544
    %583 = vmatprep.subr.mxu0 0.0
    %584 = vmatpush2.msra.mxu0 0.0
    %585 = vmatprep.subr.mxu0 0.0
    %586 = vmatpush2.msra.mxu0 0.0
    %587 = vmatprep.subr.mxu0 0.0
    %588 = vmatpush2.msra.mxu0 0.0
    %589 = vmatprep.subr.mxu0 0.0
    %590 = vmatpush2.msra.mxu0 0.0
    %591 = vmatprep.subr.mxu0 0.0
    %592 = vmatpush2.msra.mxu0 0.0
    %593 = vmatprep.subr.mxu0 0.0
    %594 = vmatpush2.msra.mxu0 0.0
    %595 = vmatprep.subr.mxu0 0.0
    %596 = vmatpush2.msra.mxu0 0.0
    %597 = vmatprep.subr.mxu0 0.0
    %598 = vmatpush2.msra.mxu0 0.0
    %599 = vmatprep.subr.mxu0 0.0
    %600 = vmatpush2.msra.mxu0 0.0
    %601 = vmatprep.subr.mxu0 0.0
    %602 = vmatpush2.msra.mxu0 0.0
    %603 = vmatprep.subr.mxu0 0.0
    %604 = vmatpush2.msra.mxu0 0.0
    %605 = vmatprep.subr.mxu0 0.0
    %606 = vmatpush2.msra.mxu0 0.0
    %607 = vmatprep.subr.mxu0 0.0
    %608 = vmatpush2.msra.mxu0 0.0
    %609 = vmatprep.subr.mxu0 0.0
    %610 = vmatpush2.msra.mxu0 0.0
    %611 = vmatprep.subr.mxu0 0.0
    %612 = vmatpush2.msra.mxu0 0.0
    %613 = vmatprep.subr.mxu0 0.0
    %614 = vmatpush2.msra.mxu0 0.0
    %615 = vmatprep.mubr.f32.mxu0 0.0
    %616 = vmatmul.mubr.f32.gmra.mxu0 %v549
    %v617 = vpop.f32.mrf.mxu0
    %v618 = vadd.f32 0.0, %v617
    %v619 = vpop.f32.mrf.mxu0
    %620 = vdwg.mxu0
    %v622 = vsel %vm80, %v538, 0
    %624 = vmatprep.subr.mxu0 0.0
    %625 = vmatpush1.msra.mxu0 0.0
    %626 = vmatprep.subr.mxu0 0.0
    %627 = vmatpush1.msra.mxu0 0.0
    %628 = vmatprep.subr.mxu0 0.0
    %629 = vmatpush1.msra.mxu0 0.0
    %630 = vmatprep.subr.mxu0 0.0
    %631 = vmatpush1.msra.mxu0 0.0
    %632 = vmatprep.subr.mxu0 0.0
    %633 = vmatpush1.msra.mxu0 0.0
    %634 = vmatprep.subr.mxu0 0.0
    %635 = vmatpush1.msra.mxu0 0.0
    %636 = vmatprep.subr.mxu0 0.0
    %637 = vmatpush1.msra.mxu0 0.0
    %638 = vmatprep.subr.mxu0 0.0
    %639 = vmatpush1.msra.mxu0 0.0
    %640 = vmatprep.subr.mxu0 0.0
    %641 = vmatpush1.msra.mxu0 0.0
    %642 = vmatprep.subr.mxu0 0.0
    %643 = vmatpush1.msra.mxu0 0.0
    %644 = vmatprep.subr.mxu0 0.0
    %645 = vmatpush1.msra.mxu0 0.0
    %646 = vmatprep.subr.mxu0 0.0
    %647 = vmatpush1.msra.mxu0 0.0
    %648 = vmatprep.subr.mxu0 0.0
    %649 = vmatpush1.msra.mxu0 %v543
    %650 = vmatprep.subr.mxu0 0.0
    %651 = vmatpush1.msra.mxu0 %v542
    %652 = vmatprep.subr.mxu0 0.0
    %653 = vmatpush1.msra.mxu0 %v541
    %654 = vmatprep.subr.mxu0 0.0
    %655 = vmatpush1.msra.mxu0 %v540
    %656 = vmatprep.subr.mxu0 0.0
    %657 = vmatpush2.msra.mxu0 0.0
    %658 = vmatprep.subr.mxu0 0.0
    %659 = vmatpush2.msra.mxu0 0.0
    %660 = vmatprep.subr.mxu0 0.0
    %661 = vmatpush2.msra.mxu0 0.0
    %662 = vmatprep.subr.mxu0 0.0
    %663 = vmatpush2.msra.mxu0 0.0
    %664 = vmatprep.subr.mxu0 0.0
    %665 = vmatpush2.msra.mxu0 0.0
    %666 = vmatprep.subr.mxu0 0.0
    %667 = vmatpush2.msra.mxu0 0.0
    %668 = vmatprep.subr.mxu0 0.0
    %669 = vmatpush2.msra.mxu0 0.0
    %670 = vmatprep.subr.mxu0 0.0
    %671 = vmatpush2.msra.mxu0 0.0
    %672 = vmatprep.subr.mxu0 0.0
    %673 = vmatpush2.msra.mxu0 0.0
    %674 = vmatprep.subr.mxu0 0.0
    %675 = vmatpush2.msra.mxu0 0.0
    %676 = vmatprep.subr.mxu0 0.0
    %677 = vmatpush2.msra.mxu0 0.0
    %678 = vmatprep.subr.mxu0 0.0
    %679 = vmatpush2.msra.mxu0 0.0
    %680 = vmatprep.subr.mxu0 0.0
    %681 = vmatpush2.msra.mxu0 0.0
    %682 = vmatprep.subr.mxu0 0.0
    %683 = vmatpush2.msra.mxu0 0.0
    %684 = vmatprep.subr.mxu0 0.0
    %685 = vmatpush2.msra.mxu0 0.0
    %686 = vmatprep.subr.mxu0 0.0
    %687 = vmatpush2.msra.mxu0 0.0
    %688 = vmatprep.mubr.f32.mxu0 0.0
    %689 = vmatmul.mubr.f32.gmra.mxu0 %v622
    %v690 = vpop.f32.mrf.mxu0
    %v691 = vadd.f32 %v618, %v690
    %v692 = vpop.f32.mrf.mxu0
    %693 = vdwg.mxu0
    %vm694 = vcmask 99328
    %695 = vst.msk [vmem:[#allocation4] sm:$0x3] %vm694, %v691
    // Predicated region
    $region26: #{tpu_custom_call.1} parent=1 // pred_check
      _
    $region27: #{tpu_custom_call.1} parent=1 // pred_check_branch
      %697 = sbr.rel (0) target = $region29
    $region28: #{tpu_custom_call.1} parent=1 // pred_region
      %s699 = ssub.s32 32, 32
      %700 = vsyncadd [#allocation5], %s699
      %s702 = sshll.u32 [#allocation4], 4
      %s703 = int_to_ptr.vmem [resolvable:$true] %s702
      %705 = dma.vmem_to_hbm [thread:$0]  %s703, 32, %s7, [#allocation5]
    $region29: #{tpu_custom_call.1} parent=1 // pred_fallthru
      _
    // Predicated region
    $region30: #{tpu_custom_call.1} parent=1 // pred_check
      _
    $region31: #{tpu_custom_call.1} parent=1 // pred_check_branch
      %707 = sbr.rel (0) target = $region33
    $region32: #{tpu_custom_call.1} parent=1 // pred_region
      %708 = dma.done [#allocation5], 32
    $region33: #{tpu_custom_call.1} parent=1 // pred_fallthru
      _
    %709 = vsyncpa [#allocation5], 1

</llo_original>
